<compile_context>
chip_gen: v7x
topology: tpu7x:2x2x1
jax: 0.10.0
libtpu: 0.0.40
codegen_flags: <defaults>
</compile_context>

<pallas_src>
import jax
import jax.numpy as jnp
from jax.experimental import pallas as pl
from jax.experimental.pallas import tpu as pltpu

_LANE = 128          # lane-dense last dim (multiple of 128 -> unmasked stores)
_MAX_TILE_ROWS = 512 # sublane rows per grid step (keeps VMEM tiny on v5e/v7x)


def _sublane_multiple(dtype) -> int:
    # (8,128) tiles for 32-bit dtypes, (16,128) for 16-bit, (32,128) for 8-bit.
    return max(8, 32 // jnp.dtype(dtype).itemsize)


def _round_up(x: int, m: int) -> int:
    return ((x + m - 1) // m) * m


# ----------------------------------------------------------------------------
# Pallas kernel: the "load".  BlockSpec pipelining DMAs the group slab
# HBM -> VMEM; the kernel writes it to the device-resident output block.
# ----------------------------------------------------------------------------
def _load_kernel(group_ref, out_ref):
    out_ref[...] = group_ref[...]


def _grouped_load(group_2d, tile_r):
    R, L = group_2d.shape
    return pl.pallas_call(
        _load_kernel,
        out_shape=jax.ShapeDtypeStruct((R, L), group_2d.dtype),
        grid_spec=pltpu.PrefetchScalarGridSpec(
            num_scalar_prefetch=0,
            grid=(R // tile_r,),
            in_specs=[pl.BlockSpec((tile_r, L), lambda i: (i, 0))],
            out_specs=pl.BlockSpec((tile_r, L), lambda i: (i, 0)),
        ),
        compiler_params=pltpu.CompilerParams(
            # Independent tiles: shards across both TCs on v7x, neutral on
            # v5e/v6e.  Double-buffered by the Pallas pipeline on all chips.
            dimension_semantics=("parallel",),
        ),
    )(group_2d)


# ----------------------------------------------------------------------------
# Tensor group: flattens the guarded layer's params into one lane-dense slab.
# ----------------------------------------------------------------------------
class TensorGroup:
    def __init__(self, params):
        params = list(params)
        assert params, "empty tensor group"
        self.dtype = params[0].dtype
        self.shapes = [p.shape for p in params]
        self.sizes = [int(p.size) for p in params]
        flat = jnp.concatenate([p.reshape(-1).astype(self.dtype) for p in params])
        self.numel = int(flat.size)

        sub = _sublane_multiple(self.dtype)
        rows = pl.cdiv(self.numel, _LANE)
        self.tile_r = min(_MAX_TILE_ROWS, _round_up(rows, sub))
        padded_rows = _round_up(rows, self.tile_r)
        pad = padded_rows * _LANE - self.numel
        # Packed slab kept in HBM until load() moves it onto the device.
        self.packed = jnp.pad(flat, (0, pad)).reshape(padded_rows, _LANE)

        self.loaded = None         # packed device-resident copy
        self.loaded_params = None  # re-assembled per-parameter views

    def load(self):
        self.loaded = _grouped_load(self.packed, self.tile_r)
        flat = self.loaded.reshape(-1)
        out, off = [], 0
        for shape, size in zip(self.shapes, self.sizes):
            out.append(flat[off:off + size].reshape(shape))
            off += size
        self.loaded_params = out
        return self.loaded

    def unload(self, copy_back=False):
        # TODO(synk): device -> host/pinned-memory offload has no clean Pallas
        # equivalent in-script; drop the device-resident copy instead.
        self.loaded = None
        self.loaded_params = None


# ----------------------------------------------------------------------------
# MemoryPlanContext / GroupedMemoryPlanner / GroupedInitialLoader
# ----------------------------------------------------------------------------
class MemoryPlanContext:
    INITIALIZED = False
    EVENT_NUM = 0

    @classmethod
    def init(cls, event_num=1):
        # TODO(synk): CUDA memory/compute streams and torch.cuda.Event have no
        # Pallas equivalent; async load + record/wait/synchronize are modeled
        # by JAX async dispatch of the pallas_call + jax.block_until_ready.
        cls.EVENT_NUM = event_num
        cls.INITIALIZED = True


class GroupedMemoryPlanner:
    def __init__(self, event_id: int, tensor_group: TensorGroup = None):
        assert MemoryPlanContext.INITIALIZED, (
            "MemPlanContext is not initialized before creating a PreLoader instance")
        self.event_id = event_id
        self.tensor_group = tensor_group

    def load(self, event_id: int):
        # memory-stream copy + event record: launch the group-load kernel
        # (JAX dispatch is asynchronous, so this does not block the host).
        return self.tensor_group.load()

    def guard(self, event_id: int):
        # compute stream waits on the event: block until the load is complete.
        if self.tensor_group.loaded is not None:
            self.tensor_group.loaded = jax.block_until_ready(self.tensor_group.loaded)

    def unload(self, event_id: int, copy_back=False):
        self.tensor_group.unload(copy_back=copy_back)


class GroupedInitialLoader(GroupedMemoryPlanner):
    def __init__(self, event_id, tensor_group: TensorGroup):
        super().__init__(event_id, tensor_group)

    def forward(self):
        self.load(self.event_id)
        self.guard(self.event_id)
        # MEMORY_STREAM.synchronize(): ensure the group DMA fully completed.
        jax.block_until_ready(self.tensor_group.loaded)


if __name__ == "__main__":
    key = jax.random.PRNGKey(0)
    kw, kb = jax.random.split(key, 2)

    # Tensor group of the guarded layer: conv weight + bias (small shapes).
    w = jax.random.normal(kw, (8, 4, 3, 3), dtype=jnp.float32)   # 288 elems
    b = jax.random.normal(kb, (8,), dtype=jnp.float32)           # 8 elems

    MemoryPlanContext.init(event_num=1)
    group = TensorGroup((w, b))
    loader = GroupedInitialLoader(event_id=0, tensor_group=group)

    loader.forward()

    loaded = jax.block_until_ready(group.loaded)
    lw, lb = group.loaded_params

    # The tensor group must be device-resident and bit-exact after the load.
    flat = jnp.concatenate([w.reshape(-1), b.reshape(-1)])
    assert loaded.shape == group.packed.shape
    assert bool(jnp.array_equal(loaded.reshape(-1)[: flat.size], flat))
    assert lw.dtype == w.dtype and bool(jnp.array_equal(lw, w))
    assert lb.dtype == b.dtype and bool(jnp.array_equal(lb, b))

    print("KERNEL_OK")
</pallas_src>

<mosaic_0001>
module attributes {stable_mosaic.version = 11 : i64} {
  func.func @_load_kernel(%arg0: i32, %arg1: memref<8x128xf32, #tpu.memory_space<vmem>>, %arg2: memref<8x128xf32, #tpu.memory_space<vmem>>) attributes {dimension_semantics = [#tpu.dimension_semantics<parallel>], iteration_bounds = array<i64: 1>, scalar_prefetch = 0 : i64, scratch_operands = 0 : i64, tpu.core_type = #tpu.core_type<tc>, window_params = [{transform_indices = @transform_0, window_bounds = array<i64: 8, 128>}, {transform_indices = @transform_1, window_bounds = array<i64: 8, 128>}]} {
    %c0 = arith.constant 0 : index
    %c0_0 = arith.constant 0 : index
    %0 = vector.load %arg1[%c0, %c0_0] : memref<8x128xf32, #tpu.memory_space<vmem>>, vector<8x128xf32>
    %c0_1 = arith.constant 0 : index
    %c0_2 = arith.constant 0 : index
    %1 = vector.load %arg2[%c0_1, %c0_2] : memref<8x128xf32, #tpu.memory_space<vmem>>, vector<8x128xf32>
    tpu.vector_store %arg2[%c0_1, %c0_2], %0 {strides = array<i32>} : memref<8x128xf32, #tpu.memory_space<vmem>>, vector<8x128xf32>,
    return
  }
  func.func @transform_0(%arg0: i32) -> (i32, i32) {
    %c0_i32 = arith.constant 0 : i32
    %c0_i32_0 = arith.constant 0 : i32
    return %arg0, %c0_i32 : i32, i32
  }
  func.func @transform_1(%arg0: i32) -> (i32, i32) {
    %c0_i32 = arith.constant 0 : i32
    %c0_i32_0 = arith.constant 0 : i32
    return %arg0, %c0_i32 : i32, i32
  }
}

</mosaic_0001>

<llo_original>
// kernel: tpu_custom_call.1
$region0: #{tpu_custom_call.1}
  #allocation0 [shape = 'u32[]', space=smem, size = 0x4, offset = 0x4, fixed_abs, tag = 'smem constant byte address 0x4 - core index']
  #allocation1 [shape = 'u32[144,128]{1,0:T(1,128)}', space=vmem, size = 0x12000, scoped, tag = 'internal scratch']
  %s0 = inlined_call_operand.hbm [shape: f32[8,128], index: 0, kind: input, shape index: {}]
  %s1 = inlined_call_operand.hbm [shape: f32[8,128], index: 1, kind: output, shape index: {}]
  %s2 = sld [smem:[#allocation0]]
  $region18: #{tpu_custom_call.1} parent=0
    _
  %s4 = ssub.s32 1, %s2
  %s5 = scalar_select 0, %s4, %s2
  $region1: #{tpu_custom_call.1} parent=0
    #allocation2 [shape = 'u8[4096]{0}', space=vmem, size = 0x1000, scoped, tag = 'input window, operand 0, single buffered']
    #allocation3 [shape = 's32[1]{0}', space=sflag, size = 0x4, scoped, tag = 'scoped memory for tpu_custom_call.1']
    #allocation4 [shape = 's32[1]{0}', space=sflag, size = 0x4, scoped, tag = 'scoped memory for tpu_custom_call.1']
    #allocation5 [shape = 'u8[4096]{0}', space=vmem, size = 0x1000, scoped, tag = 'output window, operand 0, single buffered']
    %6 = vsyncpa [#allocation3], 0
    %7 = vsyncpa [#allocation4], 0
    // Predicated region
    $region2: #{tpu_custom_call.1} parent=1 // pred_check
      _
    $region3: #{tpu_custom_call.1} parent=1 // pred_check_branch
      %9 = sbr.rel (0) target = $region5
    $region4: #{tpu_custom_call.1} parent=1 // pred_region
      %s11 = ssub.s32 128, 128
      %12 = vsyncadd [#allocation3], %s11
      %s14 = sshll.u32 [#allocation2], 4
      %s15 = int_to_ptr.vmem [resolvable:$true] %s14
      %17 = dma.hbm_to_vmem [thread:$0]  %s0, 128, %s15, [#allocation3]
    $region5: #{tpu_custom_call.1} parent=1 // pred_fallthru
      _
    // Predicated region
    $region6: #{tpu_custom_call.1} parent=1 // pred_check
      _
    $region7: #{tpu_custom_call.1} parent=1 // pred_check_branch
      %19 = sbr.rel (0) target = $region9
    $region8: #{tpu_custom_call.1} parent=1 // pred_region
      %20 = dma.done [#allocation3], 128
    $region9: #{tpu_custom_call.1} parent=1 // pred_fallthru
      _
    %v21 = vld [vmem:[#allocation2] sm:$0xff]
    %22 = vst [vmem:[#allocation5] sm:$0xff] %v21
    // Predicated region
    $region10: #{tpu_custom_call.1} parent=1 // pred_check
      _
    $region11: #{tpu_custom_call.1} parent=1 // pred_check_branch
      %24 = sbr.rel (0) target = $region13
    $region12: #{tpu_custom_call.1} parent=1 // pred_region
      %s26 = ssub.s32 128, 128
      %27 = vsyncadd [#allocation4], %s26
      %s29 = sshll.u32 [#allocation5], 4
      %s30 = int_to_ptr.vmem [resolvable:$true] %s29
      %32 = dma.vmem_to_hbm [thread:$0]  %s30, 128, %s1, [#allocation4]
    $region13: #{tpu_custom_call.1} parent=1 // pred_fallthru
      _
    // Predicated region
    $region14: #{tpu_custom_call.1} parent=1 // pred_check
      _
    $region15: #{tpu_custom_call.1} parent=1 // pred_check_branch
      %34 = sbr.rel (0) target = $region17
    $region16: #{tpu_custom_call.1} parent=1 // pred_region
      %35 = dma.done [#allocation4], 128
    $region17: #{tpu_custom_call.1} parent=1 // pred_fallthru
      _
    %36 = vsyncpa [#allocation3], 1
    %37 = vsyncpa [#allocation4], 1

</llo_original>
